<compile_context>
chip_gen: v5e
topology: v5e:2x2
jax: 0.10.0
libtpu: 0.0.40
codegen_flags: <defaults>
</compile_context>

<pallas_src>
import functools
import math

import numpy as np
import jax
import jax.numpy as jnp
from jax import lax
from jax.experimental import pallas as pl
from jax.experimental.pallas import tpu as pltpu


def _round_up(x, m):
    return ((x + m - 1) // m) * m


def _vmem_limit(est_bytes):
    # explicit limit with slack; capped at 48 MiB so it never equals v7x's
    # entire 64 MiB physical VMEM (leave compiler headroom).
    return int(min(max(int(est_bytes) + (4 << 20), 16 << 20), 48 << 20))


# ----------------------------------------------------------------------------
# Kernel 1: fused stem conv (im2col matmul) + SiLU + head conv (1x1 matmul) + SiLU
#           stem result hoisted into a per-M-tile VMEM scratch (computed once).
# ----------------------------------------------------------------------------
def _fused_stem_head_kernel(x_ref, ws_ref, bs_ref, wh_ref, bh_ref, o_ref, h_ref):
    # Stem matmul+bias+SiLU computed ONCE per M tile: axis 1 is "arbitrary",
    # so for a fixed i all j iterations run back-to-back on the same core and
    # the h_ref scratch carries across them.
    @pl.when(pl.program_id(1) == 0)
    def _():
        h = jnp.dot(x_ref[...], ws_ref[...], preferred_element_type=jnp.float32)
        h = h + bs_ref[...]
        h = h * jax.nn.sigmoid(h)                 # SiLU (f32 epilogue: v5e-safe)
        h_ref[...] = h.astype(jnp.bfloat16)       # bf16 scratch == MXU-ready feed

    # head: consumed straight from VMEM -- no HBM round trip of h
    y = jnp.dot(h_ref[...], wh_ref[...], preferred_element_type=jnp.float32)
    y = y + bh_ref[...]
    o_ref[...] = (y * jax.nn.sigmoid(y)).astype(o_ref.dtype)   # SiLU, bf16 store


def fused_stem_head(cols_bf16, w_stem, b_stem, w_head, b_head, tm=1024):
    """cols_bf16: (M, K1) bf16 -> (M, Cf_p) bf16 with Cf_p = round_up(Cf, 128)."""
    M, K1 = cols_bf16.shape
    Cmid = w_stem.shape[1]
    Cf = w_head.shape[1]
    Cf_p = _round_up(Cf, 128)                  # lane-dense output channels
    if Cf_p != Cf:
        w_head = jnp.pad(w_head, ((0, 0), (0, Cf_p - Cf)))
        b_head = jnp.pad(b_head, ((0, Cf_p - Cf),))

    if Cf_p % 512 == 0:
        tn = 512
    elif Cf_p % 256 == 0:
        tn = 256
    else:
        tn = 128
    tm = min(tm, _round_up(M, 16))             # 16: bf16 sublane packing
    gm = pl.cdiv(M, tm)
    gn = Cf_p // tn
    m_pad = gm * tm
    if m_pad != M:
        cols_bf16 = jnp.pad(cols_bf16, ((0, m_pad - M), (0, 0)))

    ws_bf = w_stem.astype(jnp.bfloat16)
    wh_bf = w_head.astype(jnp.bfloat16)
    bs = b_stem.reshape(1, Cmid).astype(jnp.float32)
    bh = b_head.reshape(1, Cf_p).astype(jnp.float32)

    # double-buffered blocks + single-buffered stem scratch
    est = 2 * (tm * K1 * 2 + K1 * Cmid * 2 + Cmid * 4
               + Cmid * tn * 2 + tn * 4 + tm * tn * 2) + tm * Cmid * 2

    # TODO(synk): single-buffer the constant-index weight/bias blocks with
    # pipeline_mode=pl.Buffered(1) once verified on the target mosaic; their
    # constant index maps already avoid re-DMA, so only a little VMEM is left
    # on the table.
    out = pl.pallas_call(
        _fused_stem_head_kernel,
        out_shape=jax.ShapeDtypeStruct((m_pad, Cf_p), jnp.bfloat16),
        grid_spec=pltpu.PrefetchScalarGridSpec(
            num_scalar_prefetch=0,
            grid=(gm, gn),
            in_specs=[
                pl.BlockSpec((tm, K1), lambda i, j: (i, 0)),
                pl.BlockSpec((K1, Cmid), lambda i, j: (0, 0)),
                pl.BlockSpec((1, Cmid), lambda i, j: (0, 0)),
                pl.BlockSpec((Cmid, tn), lambda i, j: (0, j)),
                pl.BlockSpec((1, tn), lambda i, j: (0, j)),
            ],
            out_specs=pl.BlockSpec((tm, tn), lambda i, j: (i, j)),
            scratch_shapes=[pltpu.VMEM((tm, Cmid), jnp.bfloat16)],
        ),
        compiler_params=pltpu.CompilerParams(
            # M tiles stay megacore-parallel; channel tiles are "arbitrary" so
            # the stem scratch carries across j on one core.
            dimension_semantics=("parallel", "arbitrary"),
            vmem_limit_bytes=_vmem_limit(est),
        ),
    )(cols_bf16, ws_bf, bs, wh_bf, bh)
    return out[:M, :], Cf_p


# ----------------------------------------------------------------------------
# Kernel 2: RMAC region max-pool (single call, all levels) + L2N
#   * bf16 feature map DMA'd HBM->VMEM once (single-buffered scratch)
#   * row-streamed masked max (truncation semantics at the border)
#   * L2N in f32 with the EUP reciprocal
# ----------------------------------------------------------------------------
def _rmac_l2n_kernel(sz_max, eps, regions_ref, feat_hbm, out_ref, feat_vmem, copy_sem):
    # regions_ref: SMEM (R, 3) int32 rows of (row0, col0, size)
    # feat_hbm:    raw HBM ref (H, W, N, C) bf16 (memory_space=pl.ANY)
    # feat_vmem:   VMEM scratch (H, W, N, C) bf16, filled once at r == 0
    # out_ref:     VMEM (1, N, C) f32 block for region r
    r = pl.program_id(0)

    @pl.when(r == 0)   # grid axis is "arbitrary" -> r==0 runs first on the core
    def _():
        cp = pltpu.make_async_copy(feat_hbm, feat_vmem, copy_sem)
        cp.start()
        cp.wait()

    H, W, Nb, C = feat_vmem.shape
    r0 = regions_ref[r, 0]
    c0 = regions_ref[r, 1]
    sz = regions_ref[r, 2]

    col_ids = lax.broadcasted_iota(jnp.int32, (W, 1, 1), 0)
    col_ok = jnp.logical_and(col_ids >= c0, col_ids < c0 + sz)  # truncates at W
    fill = jnp.asarray(-jnp.inf, dtype=feat_vmem.dtype)

    def body(i, acc):
        # clamp the row index so an out-of-range row never reads OOB; a row
        # past the border just re-contributes the last valid row (max-safe).
        ri = jnp.clip(r0 + jnp.minimum(i, sz - 1), 0, H - 1)
        strip = feat_vmem[ri]                                    # (W, Nb, C) bf16
        keep = jnp.logical_and(col_ok, i < sz)
        strip = jnp.where(keep, strip, fill)
        return jnp.maximum(acc, jnp.max(strip, axis=0))          # (Nb, C) bf16

    acc0 = jnp.full((Nb, C), -jnp.inf, feat_vmem.dtype)
    vmax = lax.fori_loop(0, sz_max, body, acc0).astype(jnp.float32)

    # L2N over channels: x / (||x||_2 + eps); divide runs on the (idle) EUP slot
    ssq = jnp.sum(vmax * vmax, axis=-1, keepdims=True)
    inv = pl.reciprocal(jnp.sqrt(ssq) + eps, approx=True)
    out_ref[0] = vmax * inv


def rmac_l2n(feat_hwnc, regions_np, eps=1e-6):
    # One pallas_call for ALL region sizes / levels: the feature map is read
    # from HBM exactly once and held single-buffered in VMEM.
    # TODO(synk): add a batch-tile grid axis for large N to keep VMEM flat on v7x.
    H, W, N, C = feat_hwnc.shape
    R = regions_np.shape[0]
    sz_max = int(regions_np[:, 2].max())
    regions = jnp.asarray(regions_np, dtype=jnp.int32)
    kernel = functools.partial(_rmac_l2n_kernel, sz_max, float(eps))

    feat_bytes = H * W * max(N, 8) * _round_up(C, 128) * feat_hwnc.dtype.itemsize
    out_bytes = max(N, 8) * _round_up(C, 128) * 4
    out = pl.pallas_call(
        kernel,
        out_shape=jax.ShapeDtypeStruct((R, N, C), jnp.float32),
        grid_spec=pltpu.PrefetchScalarGridSpec(
            num_scalar_prefetch=1,               # region table lands in SMEM
            grid=(R,),
            in_specs=[pl.BlockSpec(memory_space=pl.ANY)],   # raw HBM, manual DMA
            out_specs=pl.BlockSpec((1, N, C), lambda r, reg: (r, 0, 0)),
            scratch_shapes=[
                pltpu.VMEM((H, W, N, C), feat_hwnc.dtype),  # single feat buffer
                pltpu.SemaphoreType.DMA,
            ],
        ),
        compiler_params=pltpu.CompilerParams(
            # "arbitrary": the r==0 copy must precede every region on the core.
            dimension_semantics=("arbitrary",),
            vmem_limit_bytes=_vmem_limit(feat_bytes + 2 * out_bytes),
        ),
    )(regions, feat_hwnc)
    # (R, N, C) -> (N, C, 1, R): matches torch.cat([maxpool(region)], dim=-1)
    return jnp.transpose(out, (1, 2, 0))[:, :, None, :]


# ----------------------------------------------------------------------------
# Static RMAC region geometry (identical arithmetic to the reference RMAC)
# ----------------------------------------------------------------------------
def rmac_regions(H, W, L=(1, 2, 3)):
    ovr = 0.4
    steps = np.array([2, 3, 4, 5, 6, 7], dtype=np.float64)
    w = min(W, H)
    b = (max(H, W) - w) / (steps - 1)
    idx = int(np.argmin(np.abs(((w ** 2 - w * b) / (w ** 2)) - ovr)))
    Wd = Hd = 0
    if H < W:
        Wd = idx + 1
    elif H > W:
        Hd = idx + 1
    regions = []
    for l in L:
        wl = math.floor(2 * w / (l + 1))
        wl2 = math.floor(wl / 2 - 1)
        bW = 0.0 if (l + Wd == 1) else (W - wl) / (l + Wd - 1)
        cenW = [math.floor(wl2 + i * bW) - wl2 for i in range(l - 1 + Wd + 1)]
        bH = 0.0 if (l + Hd == 1) else (H - wl) / (l + Hd - 1)
        cenH = [math.floor(wl2 + i * bH) - wl2 for i in range(l - 1 + Hd + 1)]
        for i_ in cenH:
            for j_ in cenW:
                if wl == 0:
                    continue
                regions.append((int(i_), int(j_), int(wl)))
    return np.asarray(regions, dtype=np.int32)


# ----------------------------------------------------------------------------
# Glue: bf16 im2col for the 3x3 stride-2 'SAME' stem conv (plain JAX, layout only)
# ----------------------------------------------------------------------------
def im2col_3x3_s2_same(x_nhwc_bf16):
    N, H, W, C = x_nhwc_bf16.shape
    Ho, Wo = H // 2, W // 2
    xp = jnp.pad(x_nhwc_bf16, ((0, 0), (0, 1), (0, 1), (0, 0)))  # tf 'SAME' (even H, W)
    patches = []
    for dy in range(3):
        for dx in range(3):
            patches.append(xp[:, dy:dy + 2 * Ho:2, dx:dx + 2 * Wo:2, :])
    p = jnp.stack(patches, axis=3)            # (N, Ho, Wo, 9, C)
    p = jnp.transpose(p, (1, 2, 0, 3, 4))     # (Ho, Wo, N, 9, C): row order chosen so the
    return p.reshape(Ho * Wo * N, 9 * C), (N, Ho, Wo)  # matmul output reshapes straight
                                                       # to (Ho, Wo, N, Cf) -- no transpose


def effb3ns_rmac_forward(x_nchw, params, regions_np):
    x = jnp.transpose(x_nchw, (0, 2, 3, 1)).astype(jnp.bfloat16)  # NCHW -> NHWC, bf16 cols
    cols, (N, Ho, Wo) = im2col_3x3_s2_same(x)
    Cf = params["w_head"].shape[1]
    h, Cf_p = fused_stem_head(cols, params["w_stem"], params["b_stem"],
                              params["w_head"], params["b_head"])
    feat = h.reshape(Ho, Wo, N, Cf_p)         # (H, W, N, C) bf16 layout for RMAC slicing
    out = rmac_l2n(feat, regions_np)          # (N, Cf_p, 1, R) f32
    return out[:, :Cf, :, :]                  # drop lane-padding channels (all zero)


if __name__ == "__main__":
    key = jax.random.PRNGKey(0)
    k1, k2, k3, k4, k5 = jax.random.split(key, 5)

    Nb, Cin, Hin, Win = 2, 3, 16, 16
    Cmid, Cfeat = 24, 64  # small stand-ins for EffNet-B3's 40 stem / 1536 head channels

    x = jax.random.normal(k1, (Nb, Cin, Hin, Win), dtype=jnp.float32)
    params = {
        "w_stem": 0.1 * jax.random.normal(k2, (9 * Cin, Cmid), jnp.float32),
        "b_stem": 0.01 * jax.random.normal(k3, (Cmid,), jnp.float32),
        "w_head": 0.1 * jax.random.normal(k4, (Cmid, Cfeat), jnp.float32),
        "b_head": 0.01 * jax.random.normal(k5, (Cfeat,), jnp.float32),
    }

    Ho, Wo = Hin // 2, Win // 2
    regions_np = rmac_regions(Ho, Wo)          # (14, 3): L=1,2,3 levels on an 8x8 map

    out = effb3ns_rmac_forward(x, params, regions_np)
    out = jax.block_until_ready(out)

    assert out.shape == (Nb, Cfeat, 1, regions_np.shape[0]), out.shape
    # sanity: each (n, :, 0, r) vector is unit-norm after L2N
    # (5e-3 tolerance accounts for the approx EUP reciprocal)
    norms = jnp.linalg.norm(out[:, :, 0, :], axis=1)
    assert bool(jnp.all(jnp.abs(norms - 1.0) < 5e-3)), norms
    assert bool(jnp.all(jnp.isfinite(out)))
    print("KERNEL_OK")
</pallas_src>

<mosaic_0001>
module attributes {stable_mosaic.version = 11 : i64} {
  func.func @_fused_stem_head_kernel(%arg0: i32, %arg1: i32, %arg2: memref<128x27xbf16, #tpu.memory_space<vmem>>, %arg3: memref<27x24xbf16, #tpu.memory_space<vmem>>, %arg4: memref<1x24xf32, #tpu.memory_space<vmem>>, %arg5: memref<24x128xbf16, #tpu.memory_space<vmem>>, %arg6: memref<1x128xf32, #tpu.memory_space<vmem>>, %arg7: memref<128x128xbf16, #tpu.memory_space<vmem>>, %arg8: memref<128x24xbf16, #tpu.memory_space<vmem>>) attributes {dimension_semantics = [#tpu.dimension_semantics<parallel>, #tpu.dimension_semantics<arbitrary>], iteration_bounds = array<i64: 1, 1>, scalar_prefetch = 0 : i64, scratch_operands = 1 : i64, tpu.core_type = #tpu.core_type<tc>, window_params = [{transform_indices = @transform_0, window_bounds = array<i64: 128, 27>}, {pipeline_mode = #tpu.pipeline_mode<synchronous>, transform_indices = @transform_1, window_bounds = array<i64: 27, 24>}, {pipeline_mode = #tpu.pipeline_mode<synchronous>, transform_indices = @transform_2, window_bounds = array<i64: 1, 24>}, {transform_indices = @transform_3, window_bounds = array<i64: 24, 128>}, {transform_indices = @transform_4, window_bounds = array<i64: 1, 128>}, {transform_indices = @transform_5, window_bounds = array<i64: 128, 128>}]} {
    %c0_i32 = arith.constant 0 : i32
    %0 = arith.cmpi eq, %arg1, %c0_i32 : i32
    %1 = arith.extui %0 : i1 to i32
    %c0_i32_0 = arith.constant 0 : i32
    %2 = arith.cmpi ne, %1, %c0_i32_0 : i32
    scf.if %2 {
      %c0_9 = arith.constant 0 : index
      %c0_10 = arith.constant 0 : index
      %17 = vector.load %arg2[%c0_9, %c0_10] : memref<128x27xbf16, #tpu.memory_space<vmem>>, vector<128x27xbf16>
      %c0_11 = arith.constant 0 : index
      %c0_12 = arith.constant 0 : index
      %18 = vector.load %arg3[%c0_11, %c0_12] : memref<27x24xbf16, #tpu.memory_space<vmem>>, vector<27x24xbf16>
      %cst_13 = arith.constant dense<0.000000e+00> : vector<128x24xf32>
      %19 = tpu.matmul %17, %18, %cst_13 {dimension_numbers = #tpu.dot_dimension_numbers<[1], [0], [0], [1], [0, 0, 1, 1], [], []>} : vector<128x27xbf16>, vector<27x24xbf16>, vector<128x24xf32> -> vector<128x24xf32>
      %c0_14 = arith.constant 0 : index
      %c0_15 = arith.constant 0 : index
      %20 = vector.load %arg4[%c0_14, %c0_15] : memref<1x24xf32, #tpu.memory_space<vmem>>, vector<1x24xf32>
      %21 = vector.broadcast %20 : vector<1x24xf32> to vector<128x24xf32>
      %22 = arith.addf %19, %21 : vector<128x24xf32>
      %23 = arith.negf %22 : vector<128x24xf32>
      %24 = math.exp %23 : vector<128x24xf32>
      %cst_16 = arith.constant 1.000000e+00 : f32
      %25 = vector.broadcast %cst_16 : f32 to vector<128x24xf32>
      %26 = arith.addf %25, %24 : vector<128x24xf32>
      %27 = arith.divf %25, %26 : vector<128x24xf32>
      %28 = arith.mulf %22, %27 : vector<128x24xf32>
      %29 = arith.truncf %28 : vector<128x24xf32> to vector<128x24xbf16>
      %c0_17 = arith.constant 0 : index
      %c0_18 = arith.constant 0 : index
      %30 = vector.load %arg8[%c0_17, %c0_18] : memref<128x24xbf16, #tpu.memory_space<vmem>>, vector<128x24xbf16>
      tpu.vector_store %arg8[%c0_17, %c0_18], %29 {strides = array<i32>} : memref<128x24xbf16, #tpu.memory_space<vmem>>, vector<128x24xbf16>,
    } else {
    }
    %c0 = arith.constant 0 : index
    %c0_1 = arith.constant 0 : index
    %3 = vector.load %arg8[%c0, %c0_1] : memref<128x24xbf16, #tpu.memory_space<vmem>>, vector<128x24xbf16>
    %c0_2 = arith.constant 0 : index
    %c0_3 = arith.constant 0 : index
    %4 = vector.load %arg5[%c0_2, %c0_3] : memref<24x128xbf16, #tpu.memory_space<vmem>>, vector<24x128xbf16>
    %cst = arith.constant dense<0.000000e+00> : vector<128x128xf32>
    %5 = tpu.matmul %3, %4, %cst {dimension_numbers = #tpu.dot_dimension_numbers<[1], [0], [0], [1], [0, 0, 1, 1], [], []>} : vector<128x24xbf16>, vector<24x128xbf16>, vector<128x128xf32> -> vector<128x128xf32>
    %c0_4 = arith.constant 0 : index
    %c0_5 = arith.constant 0 : index
    %6 = vector.load %arg6[%c0_4, %c0_5] : memref<1x128xf32, #tpu.memory_space<vmem>>, vector<1x128xf32>
    %7 = vector.broadcast %6 : vector<1x128xf32> to vector<128x128xf32>
    %8 = arith.addf %5, %7 : vector<128x128xf32>
    %9 = arith.negf %8 : vector<128x128xf32>
    %10 = math.exp %9 : vector<128x128xf32>
    %cst_6 = arith.constant 1.000000e+00 : f32
    %11 = vector.broadcast %cst_6 : f32 to vector<128x128xf32>
    %12 = arith.addf %11, %10 : vector<128x128xf32>
    %13 = arith.divf %11, %12 : vector<128x128xf32>
    %14 = arith.mulf %8, %13 : vector<128x128xf32>
    %15 = arith.truncf %14 : vector<128x128xf32> to vector<128x128xbf16>
    %c0_7 = arith.constant 0 : index
    %c0_8 = arith.constant 0 : index
    %16 = vector.load %arg7[%c0_7, %c0_8] : memref<128x128xbf16, #tpu.memory_space<vmem>>, vector<128x128xbf16>
    tpu.vector_store %arg7[%c0_7, %c0_8], %15 {strides = array<i32>} : memref<128x128xbf16, #tpu.memory_space<vmem>>, vector<128x128xbf16>,
    return
  }
  func.func @transform_0(%arg0: i32, %arg1: i32) -> (i32, i32) {
    %c0_i32 = arith.constant 0 : i32
    %c0_i32_0 = arith.constant 0 : i32
    return %arg0, %c0_i32 : i32, i32
  }
  func.func @transform_1(%arg0: i32, %arg1: i32) -> (i32, i32) {
    %c0_i32 = arith.constant 0 : i32
    %c0_i32_0 = arith.constant 0 : i32
    %c0_i32_1 = arith.constant 0 : i32
    return %c0_i32, %c0_i32_0 : i32, i32
  }
  func.func @transform_2(%arg0: i32, %arg1: i32) -> (i32, i32) {
    %c0_i32 = arith.constant 0 : i32
    %c0_i32_0 = arith.constant 0 : i32
    %c0_i32_1 = arith.constant 0 : i32
    return %c0_i32, %c0_i32_0 : i32, i32
  }
  func.func @transform_3(%arg0: i32, %arg1: i32) -> (i32, i32) {
    %c0_i32 = arith.constant 0 : i32
    %c0_i32_0 = arith.constant 0 : i32
    return %c0_i32, %arg1 : i32, i32
  }
  func.func @transform_4(%arg0: i32, %arg1: i32) -> (i32, i32) {
    %c0_i32 = arith.constant 0 : i32
    %c0_i32_0 = arith.constant 0 : i32
    return %c0_i32, %arg1 : i32, i32
  }
  func.func @transform_5(%arg0: i32, %arg1: i32) -> (i32, i32) {
    %c0_i32 = arith.constant 0 : i32
    return %arg0, %arg1 : i32, i32
  }
}

</mosaic_0001>

<llo_original>
// kernel: tpu_custom_call.1
$region0: #{tpu_custom_call.1}
  #allocation0 [shape = 'u32[]', space=smem, size = 0x4, offset = 0x4, fixed_abs, tag = 'smem constant byte address 0x4 - core index']
  #allocation1 [shape = 'u32[72,128]{1,0:T(1,128)}', space=vmem, size = 0x9000, scoped, tag = 'internal scratch']
  #allocation2 [shape = 'bf16[128,24]{1,0:T(8,128)(2,1)}', space=vmem, size = 0x8000, scoped, tag = 'scratch operand']
  %s0 = inlined_call_operand.vmem [shape: bf16[128,27], index: 0, kind: input, shape index: {}]
  %s1 = inlined_call_operand.vmem [shape: bf16[27,24], index: 1, kind: input, shape index: {}]
  %s2 = inlined_call_operand.vmem [shape: f32[1,24], index: 2, kind: input, shape index: {}]
  %s3 = inlined_call_operand.vmem [shape: bf16[24,128], index: 3, kind: input, shape index: {}]
  %s4 = inlined_call_operand.vmem [shape: f32[1,128], index: 4, kind: input, shape index: {}]
  %s5 = inlined_call_operand.hbm [shape: bf16[128,128], index: 5, kind: output, shape index: {}]
  %s6 = sld [smem:[#allocation0]]
  $region34: #{tpu_custom_call.1} parent=0
    _
  %s8 = ssub.s32 1, %s6
  %s9 = scalar_select 0, %s8, %s6
  $region1: #{tpu_custom_call.1} parent=0
    #allocation3 [shape = 'u8[32768]{0}', space=vmem, size = 0x8000, scoped, tag = 'output window, operand 0, single buffered']
    #allocation4 [shape = 's32[1]{0}', space=sflag, size = 0x4, scoped, tag = 'scoped memory for tpu_custom_call.1']
    %10 = vsyncpa [#allocation4], 0
    // Predicated region
    $region2: #{tpu_custom_call.1} parent=1 // pred_check
      _
    $region3: #{tpu_custom_call.1} parent=1 // pred_check_branch
      %12 = sbr.rel (0) target = $region5
    $region4: #{tpu_custom_call.1} parent=1 // pred_region
      _
    $region5: #{tpu_custom_call.1} parent=1 // pred_fallthru
      _
    // Predicated region
    $region6: #{tpu_custom_call.1} parent=1 // pred_check
      _
    $region7: #{tpu_custom_call.1} parent=1 // pred_check_branch
      %14 = sbr.rel (0) target = $region9
    $region8: #{tpu_custom_call.1} parent=1 // pred_region
      _
    $region9: #{tpu_custom_call.1} parent=1 // pred_fallthru
      _
    // Predicated region
    $region10: #{tpu_custom_call.1} parent=1 // pred_check
      _
    $region11: #{tpu_custom_call.1} parent=1 // pred_check_branch
      %16 = sbr.rel (0) target = $region13
    $region12: #{tpu_custom_call.1} parent=1 // pred_region
      _
    $region13: #{tpu_custom_call.1} parent=1 // pred_fallthru
      _
    // Predicated region
    $region14: #{tpu_custom_call.1} parent=1 // pred_check
      _
    $region15: #{tpu_custom_call.1} parent=1 // pred_check_branch
      %18 = sbr.rel (0) target = $region17
    $region16: #{tpu_custom_call.1} parent=1 // pred_region
      _
    $region17: #{tpu_custom_call.1} parent=1 // pred_fallthru
      _
    // Predicated region
    $region18: #{tpu_custom_call.1} parent=1 // pred_check
      _
    $region19: #{tpu_custom_call.1} parent=1 // pred_check_branch
      %20 = sbr.rel (0) target = $region21
    $region20: #{tpu_custom_call.1} parent=1 // pred_region
      _
    $region21: #{tpu_custom_call.1} parent=1 // pred_fallthru
      _
    %p22 = scmp.eq.s32.totalorder 0, 0
    // Predicated region
    $region22: #{tpu_custom_call.1} parent=1 // pred_check
      %p23 = pneg %p22
    $region23: #{tpu_custom_call.1} parent=1 // pred_check_branch
      %25 = sbr.rel (%p23) target = $region25
    $region24: #{tpu_custom_call.1} parent=1 // pred_region
      %v26 = vld [vmem:[%s0] sm:$0xf]
      %v27 = vld [vmem:[%s0 + $0x4] sm:$0xf]
      %v28 = vld [vmem:[%s0 + $0x8] sm:$0xf]
      %v29 = vld [vmem:[%s0 + $0xc] sm:$0xf]
      %v30 = vld [vmem:[%s0 + $0x10] sm:$0xf]
      %v31 = vld [vmem:[%s0 + $0x14] sm:$0xf]
      %v32 = vld [vmem:[%s0 + $0x18] sm:$0xf]
      %v33 = vld [vmem:[%s0 + $0x1c] sm:$0xf]
      %v34 = vld [vmem:[%s0 + $0x20] sm:$0xf]
      %v35 = vld [vmem:[%s0 + $0x24] sm:$0xf]
      %v36 = vld [vmem:[%s0 + $0x28] sm:$0xf]
      %v37 = vld [vmem:[%s0 + $0x2c] sm:$0xf]
      %v38 = vld [vmem:[%s0 + $0x30] sm:$0xf]
      %v39 = vld [vmem:[%s0 + $0x34] sm:$0xf]
      %v40 = vld [vmem:[%s0 + $0x38] sm:$0xf]
      %v41 = vld [vmem:[%s0 + $0x3c] sm:$0xf]
      %v42 = vld [vmem:[%s1] sm:$0xf]
      %v43 = vld [vmem:[%s1 + $0x4] sm:$0xf]
      %v44 = vld [vmem:[%s1 + $0x8] sm:$0xf]
      %v45 = vld [vmem:[%s1 + $0xc] sm:$0x3]
      %v46 = vld [vmem:[%s2] sm:$0x1]
      %v48 = vperm.slane %v46, 0
      %v66 = vunpack.c.l.b16 %v26
      %v67 = vunpack.c.l.b16 %v27
      %v68 = vunpack.c.l.b16 %v28
      %v69 = vunpack.c.l.b16 %v29
      %v70 = vunpack.c.l.b16 %v30
      %v71 = vunpack.c.l.b16 %v31
      %v72 = vunpack.c.l.b16 %v32
      %v73 = vunpack.c.l.b16 %v33
      %v74 = vunpack.c.l.b16 %v34
      %v75 = vunpack.c.l.b16 %v35
      %v76 = vunpack.c.l.b16 %v36
      %v77 = vunpack.c.l.b16 %v37
      %v78 = vunpack.c.l.b16 %v38
      %v79 = vunpack.c.l.b16 %v39
      %v80 = vunpack.c.l.b16 %v40
      %v81 = vunpack.c.l.b16 %v41
      %v82 = vpack.c.b16 %v67, %v66
      %v83 = vpack.c.b16 %v69, %v68
      %v84 = vpack.c.b16 %v71, %v70
      %v85 = vpack.c.b16 %v73, %v72
      %v86 = vpack.c.b16 %v75, %v74
      %v87 = vpack.c.b16 %v77, %v76
      %v88 = vpack.c.b16 %v79, %v78
      %v89 = vpack.c.b16 %v81, %v80
      %v94 = vunpack.c.l.b16 %v42
      %v95 = vunpack.c.l.b16 %v43
      %v96 = vunpack.c.l.b16 %v44
      %v97 = vunpack.c.l.b16 %v45
      %v98 = vpack.c.b16 %v95, %v94
      %v99 = vpack.c.b16 %v97, %v96
      %vm101 = vcmask 220160
      %v103 = vsel %vm101, %v82, 0
      %v106 = vsel %vm101, %v83, 0
      %v109 = vsel %vm101, %v84, 0
      %v112 = vsel %vm101, %v85, 0
      %v115 = vsel %vm101, %v86, 0
      %v118 = vsel %vm101, %v87, 0
      %v121 = vsel %vm101, %v88, 0
      %v124 = vsel %vm101, %v89, 0
      %vm126 = vcmask 1044480
      %vm127 = vcmask 1045504
      %v128 = vsel %vm126, 4294967295, 65535
      %v129 = vsel %vm127, %v128, 0
      %v131 = vand.u32 %v99, %v129
      %133 = vmatpush.bf16.msra.mxu0 0
      %134 = vmatpush.bf16.msra.mxu0 0
      %135 = vmatpush.bf16.msra.mxu0 0
      %136 = vmatpush.bf16.msra.mxu0 0
      %137 = vmatpush.bf16.msra.mxu0 0
      %138 = vmatpush.bf16.msra.mxu0 0
      %139 = vmatpush.bf16.msra.mxu0 %v131
      %140 = vmatpush.bf16.msra.mxu0 %v98
      %141 = vmatmul.bf16.gmra.mxu0 %v103
      %v142 = vpop.f32.mrf.mxu0
      %v143 = vadd.f32 %v48, %v142
      %v144 = vpop.f32.mrf.mxu0
      %v145 = vadd.f32 %v48, %v144
      %146 = vmatmul.bf16.gmra.mxu0 %v106
      %v147 = vpop.f32.mrf.mxu0
      %v148 = vadd.f32 %v48, %v147
      %v149 = vpop.f32.mrf.mxu0
      %v150 = vadd.f32 %v48, %v149
      %151 = vmatmul.bf16.gmra.mxu0 %v109
      %v152 = vpop.f32.mrf.mxu0
      %v153 = vadd.f32 %v48, %v152
      %v154 = vpop.f32.mrf.mxu0
      %v155 = vadd.f32 %v48, %v154
      %156 = vmatmul.bf16.gmra.mxu0 %v112
      %v157 = vpop.f32.mrf.mxu0
      %v158 = vadd.f32 %v48, %v157
      %v159 = vpop.f32.mrf.mxu0
      %v160 = vadd.f32 %v48, %v159
      %161 = vmatmul.bf16.gmra.mxu0 %v115
      %v162 = vpop.f32.mrf.mxu0
      %v163 = vadd.f32 %v48, %v162
      %v164 = vpop.f32.mrf.mxu0
      %v165 = vadd.f32 %v48, %v164
      %166 = vmatmul.bf16.gmra.mxu0 %v118
      %v167 = vpop.f32.mrf.mxu0
      %v168 = vadd.f32 %v48, %v167
      %v169 = vpop.f32.mrf.mxu0
      %v170 = vadd.f32 %v48, %v169
      %171 = vmatmul.bf16.gmra.mxu0 %v121
      %v172 = vpop.f32.mrf.mxu0
      %v173 = vadd.f32 %v48, %v172
      %v174 = vpop.f32.mrf.mxu0
      %v175 = vadd.f32 %v48, %v174
      %176 = vmatmul.bf16.gmra.mxu0 %v124
      %v177 = vpop.f32.mrf.mxu0
      %v178 = vadd.f32 %v48, %v177
      %v179 = vpop.f32.mrf.mxu0
      %v180 = vadd.f32 %v48, %v179
      %181 = vdwg.mxu0
      %v182 = vxor.u32 %v143, 2147483648
      %v183 = vxor.u32 %v145, 2147483648
      %v184 = vxor.u32 %v148, 2147483648
      %v185 = vxor.u32 %v150, 2147483648
      %v186 = vxor.u32 %v153, 2147483648
      %v187 = vxor.u32 %v155, 2147483648
      %v188 = vxor.u32 %v158, 2147483648
      %v189 = vxor.u32 %v160, 2147483648
      %v190 = vxor.u32 %v163, 2147483648
      %v191 = vxor.u32 %v165, 2147483648
      %v192 = vxor.u32 %v168, 2147483648
      %v193 = vxor.u32 %v170, 2147483648
      %v194 = vxor.u32 %v173, 2147483648
      %v195 = vxor.u32 %v175, 2147483648
      %v196 = vxor.u32 %v178, 2147483648
      %v197 = vxor.u32 %v180, 2147483648
      %v198 = vmul.f32 %v182, 1.442695
      %v199 = vpow.pop %v198
      %v200 = vmul.f32 %v183, 1.442695
      %v201 = vpow.pop %v200
      %v202 = vmul.f32 %v184, 1.442695
      %v203 = vpow.pop %v202
      %v204 = vmul.f32 %v185, 1.442695
      %v205 = vpow.pop %v204
      %v206 = vmul.f32 %v186, 1.442695
      %v207 = vpow.pop %v206
      %v208 = vmul.f32 %v187, 1.442695
      %v209 = vpow.pop %v208
      %v210 = vmul.f32 %v188, 1.442695
      %v211 = vpow.pop %v210
      %v212 = vmul.f32 %v189, 1.442695
      %v213 = vpow.pop %v212
      %v214 = vmul.f32 %v190, 1.442695
      %v215 = vpow.pop %v214
      %v216 = vmul.f32 %v191, 1.442695
      %v217 = vpow.pop %v216
      %v218 = vmul.f32 %v192, 1.442695
      %v219 = vpow.pop %v218
      %v220 = vmul.f32 %v193, 1.442695
      %v221 = vpow.pop %v220
      %v222 = vmul.f32 %v194, 1.442695
      %v223 = vpow.pop %v222
      %v224 = vmul.f32 %v195, 1.442695
      %v225 = vpow.pop %v224
      %v226 = vmul.f32 %v196, 1.442695
      %v227 = vpow.pop %v226
      %v228 = vmul.f32 %v197, 1.442695
      %v229 = vpow.pop %v228
      %v230 = vadd.f32 %v199, 1.0
      %v231 = vadd.f32 %v201, 1.0
      %v232 = vadd.f32 %v203, 1.0
      %v233 = vadd.f32 %v205, 1.0
      %v234 = vadd.f32 %v207, 1.0
      %v235 = vadd.f32 %v209, 1.0
      %v236 = vadd.f32 %v211, 1.0
      %v237 = vadd.f32 %v213, 1.0
      %v238 = vadd.f32 %v215, 1.0
      %v239 = vadd.f32 %v217, 1.0
      %v240 = vadd.f32 %v219, 1.0
      %v241 = vadd.f32 %v221, 1.0
      %v242 = vadd.f32 %v223, 1.0
      %v243 = vadd.f32 %v225, 1.0
      %v244 = vadd.f32 %v227, 1.0
      %v245 = vadd.f32 %v229, 1.0
      %v246 = vrcp.pop %v230
      %v247 = vmul.f32 %v230, %v246
      %v248 = vsub.f32 1.0, %v247
      %v249 = vmul.f32 %v246, %v248
      %v250 = vadd.f32 %v246, %v249
      %vm251 = vweird.f32 %v230
      %vm252 = vweird.f32 %v246
      %vm253 = vmor %vm251, %vm252
      %v254 = vsel %vm253, %v246, %v250
      %v255 = vand.u32 2147483647, %v230
      %vm256 = vcmp.eq.f32.partialorder %v255, 8.507059e+37
      %v257 = vand.u32 %v230, 2147483648
      %v258 = vor.u32 1.1754944e-38, %v257
      %v259 = vsel %vm256, %v258, %v254
      %v260 = vmul.f32 1.0, %v259
      %v261 = vrcp.pop %v231
      %v262 = vmul.f32 %v231, %v261
      %v263 = vsub.f32 1.0, %v262
      %v264 = vmul.f32 %v261, %v263
      %v265 = vadd.f32 %v261, %v264
      %vm266 = vweird.f32 %v231
      %vm267 = vweird.f32 %v261
      %vm268 = vmor %vm266, %vm267
      %v269 = vsel %vm268, %v261, %v265
      %v270 = vand.u32 2147483647, %v231
      %vm271 = vcmp.eq.f32.partialorder %v270, 8.507059e+37
      %v272 = vand.u32 %v231, 2147483648
      %v273 = vor.u32 1.1754944e-38, %v272
      %v274 = vsel %vm271, %v273, %v269
      %v275 = vmul.f32 1.0, %v274
      %v276 = vrcp.pop %v232
      %v277 = vmul.f32 %v232, %v276
      %v278 = vsub.f32 1.0, %v277
      %v279 = vmul.f32 %v276, %v278
      %v280 = vadd.f32 %v276, %v279
      %vm281 = vweird.f32 %v232
      %vm282 = vweird.f32 %v276
      %vm283 = vmor %vm281, %vm282
      %v284 = vsel %vm283, %v276, %v280
      %v285 = vand.u32 2147483647, %v232
      %vm286 = vcmp.eq.f32.partialorder %v285, 8.507059e+37
      %v287 = vand.u32 %v232, 2147483648
      %v288 = vor.u32 1.1754944e-38, %v287
      %v289 = vsel %vm286, %v288, %v284
      %v290 = vmul.f32 1.0, %v289
      %v291 = vrcp.pop %v233
      %v292 = vmul.f32 %v233, %v291
      %v293 = vsub.f32 1.0, %v292
      %v294 = vmul.f32 %v291, %v293
      %v295 = vadd.f32 %v291, %v294
      %vm296 = vweird.f32 %v233
      %vm297 = vweird.f32 %v291
      %vm298 = vmor %vm296, %vm297
      %v299 = vsel %vm298, %v291, %v295
      %v300 = vand.u32 2147483647, %v233
      %vm301 = vcmp.eq.f32.partialorder %v300, 8.507059e+37
      %v302 = vand.u32 %v233, 2147483648
      %v303 = vor.u32 1.1754944e-38, %v302
      %v304 = vsel %vm301, %v303, %v299
      %v305 = vmul.f32 1.0, %v304
      %v306 = vrcp.pop %v234
      %v307 = vmul.f32 %v234, %v306
      %v308 = vsub.f32 1.0, %v307
      %v309 = vmul.f32 %v306, %v308
      %v310 = vadd.f32 %v306, %v309
      %vm311 = vweird.f32 %v234
      %vm312 = vweird.f32 %v306
      %vm313 = vmor %vm311, %vm312
      %v314 = vsel %vm313, %v306, %v310
      %v315 = vand.u32 2147483647, %v234
      %vm316 = vcmp.eq.f32.partialorder %v315, 8.507059e+37
      %v317 = vand.u32 %v234, 2147483648
      %v318 = vor.u32 1.1754944e-38, %v317
      %v319 = vsel %vm316, %v318, %v314
      %v320 = vmul.f32 1.0, %v319
      %v321 = vrcp.pop %v235
      %v322 = vmul.f32 %v235, %v321
      %v323 = vsub.f32 1.0, %v322
      %v324 = vmul.f32 %v321, %v323
      %v325 = vadd.f32 %v321, %v324
      %vm326 = vweird.f32 %v235
      %vm327 = vweird.f32 %v321
      %vm328 = vmor %vm326, %vm327
      %v329 = vsel %vm328, %v321, %v325
      %v330 = vand.u32 2147483647, %v235
      %vm331 = vcmp.eq.f32.partialorder %v330, 8.507059e+37
      %v332 = vand.u32 %v235, 2147483648
      %v333 = vor.u32 1.1754944e-38, %v332
      %v334 = vsel %vm331, %v333, %v329
      %v335 = vmul.f32 1.0, %v334
      %v336 = vrcp.pop %v236
      %v337 = vmul.f32 %v236, %v336
      %v338 = vsub.f32 1.0, %v337
      %v339 = vmul.f32 %v336, %v338
      %v340 = vadd.f32 %v336, %v339
      %vm341 = vweird.f32 %v236
      %vm342 = vweird.f32 %v336
      %vm343 = vmor %vm341, %vm342
      %v344 = vsel %vm343, %v336, %v340
      %v345 = vand.u32 2147483647, %v236
      %vm346 = vcmp.eq.f32.partialorder %v345, 8.507059e+37
      %v347 = vand.u32 %v236, 2147483648
      %v348 = vor.u32 1.1754944e-38, %v347
      %v349 = vsel %vm346, %v348, %v344
      %v350 = vmul.f32 1.0, %v349
      %v351 = vrcp.pop %v237
      %v352 = vmul.f32 %v237, %v351
      %v353 = vsub.f32 1.0, %v352
      %v354 = vmul.f32 %v351, %v353
      %v355 = vadd.f32 %v351, %v354
      %vm356 = vweird.f32 %v237
      %vm357 = vweird.f32 %v351
      %vm358 = vmor %vm356, %vm357
      %v359 = vsel %vm358, %v351, %v355
      %v360 = vand.u32 2147483647, %v237
      %vm361 = vcmp.eq.f32.partialorder %v360, 8.507059e+37
      %v362 = vand.u32 %v237, 2147483648
      %v363 = vor.u32 1.1754944e-38, %v362
      %v364 = vsel %vm361, %v363, %v359
      %v365 = vmul.f32 1.0, %v364
      %v366 = vrcp.pop %v238
      %v367 = vmul.f32 %v238, %v366
      %v368 = vsub.f32 1.0, %v367
      %v369 = vmul.f32 %v366, %v368
      %v370 = vadd.f32 %v366, %v369
      %vm371 = vweird.f32 %v238
      %vm372 = vweird.f32 %v366
      %vm373 = vmor %vm371, %vm372
      %v374 = vsel %vm373, %v366, %v370
      %v375 = vand.u32 2147483647, %v238
      %vm376 = vcmp.eq.f32.partialorder %v375, 8.507059e+37
      %v377 = vand.u32 %v238, 2147483648
      %v378 = vor.u32 1.1754944e-38, %v377
      %v379 = vsel %vm376, %v378, %v374
      %v380 = vmul.f32 1.0, %v379
      %v381 = vrcp.pop %v239
      %v382 = vmul.f32 %v239, %v381
      %v383 = vsub.f32 1.0, %v382
      %v384 = vmul.f32 %v381, %v383
      %v385 = vadd.f32 %v381, %v384
      %vm386 = vweird.f32 %v239
      %vm387 = vweird.f32 %v381
      %vm388 = vmor %vm386, %vm387
      %v389 = vsel %vm388, %v381, %v385
      %v390 = vand.u32 2147483647, %v239
      %vm391 = vcmp.eq.f32.partialorder %v390, 8.507059e+37
      %v392 = vand.u32 %v239, 2147483648
      %v393 = vor.u32 1.1754944e-38, %v392
      %v394 = vsel %vm391, %v393, %v389
      %v395 = vmul.f32 1.0, %v394
      %v396 = vrcp.pop %v240
      %v397 = vmul.f32 %v240, %v396
      %v398 = vsub.f32 1.0, %v397
      %v399 = vmul.f32 %v396, %v398
      %v400 = vadd.f32 %v396, %v399
      %vm401 = vweird.f32 %v240
      %vm402 = vweird.f32 %v396
      %vm403 = vmor %vm401, %vm402
      %v404 = vsel %vm403, %v396, %v400
      %v405 = vand.u32 2147483647, %v240
      %vm406 = vcmp.eq.f32.partialorder %v405, 8.507059e+37
      %v407 = vand.u32 %v240, 2147483648
      %v408 = vor.u32 1.1754944e-38, %v407
      %v409 = vsel %vm406, %v408, %v404
      %v410 = vmul.f32 1.0, %v409
      %v411 = vrcp.pop %v241
      %v412 = vmul.f32 %v241, %v411
      %v413 = vsub.f32 1.0, %v412
      %v414 = vmul.f32 %v411, %v413
      %v415 = vadd.f32 %v411, %v414
      %vm416 = vweird.f32 %v241
      %vm417 = vweird.f32 %v411
      %vm418 = vmor %vm416, %vm417
      %v419 = vsel %vm418, %v411, %v415
      %v420 = vand.u32 2147483647, %v241
      %vm421 = vcmp.eq.f32.partialorder %v420, 8.507059e+37
      %v422 = vand.u32 %v241, 2147483648
      %v423 = vor.u32 1.1754944e-38, %v422
      %v424 = vsel %vm421, %v423, %v419
      %v425 = vmul.f32 1.0, %v424
      %v426 = vrcp.pop %v242
      %v427 = vmul.f32 %v242, %v426
      %v428 = vsub.f32 1.0, %v427
      %v429 = vmul.f32 %v426, %v428
      %v430 = vadd.f32 %v426, %v429
      %vm431 = vweird.f32 %v242
      %vm432 = vweird.f32 %v426
      %vm433 = vmor %vm431, %vm432
      %v434 = vsel %vm433, %v426, %v430
      %v435 = vand.u32 2147483647, %v242
      %vm436 = vcmp.eq.f32.partialorder %v435, 8.507059e+37
      %v437 = vand.u32 %v242, 2147483648
      %v438 = vor.u32 1.1754944e-38, %v437
      %v439 = vsel %vm436, %v438, %v434
      %v440 = vmul.f32 1.0, %v439
      %v441 = vrcp.pop %v243
      %v442 = vmul.f32 %v243, %v441
      %v443 = vsub.f32 1.0, %v442
      %v444 = vmul.f32 %v441, %v443
      %v445 = vadd.f32 %v441, %v444
      %vm446 = vweird.f32 %v243
      %vm447 = vweird.f32 %v441
      %vm448 = vmor %vm446, %vm447
      %v449 = vsel %vm448, %v441, %v445
      %v450 = vand.u32 2147483647, %v243
      %vm451 = vcmp.eq.f32.partialorder %v450, 8.507059e+37
      %v452 = vand.u32 %v243, 2147483648
      %v453 = vor.u32 1.1754944e-38, %v452
      %v454 = vsel %vm451, %v453, %v449
      %v455 = vmul.f32 1.0, %v454
      %v456 = vrcp.pop %v244
      %v457 = vmul.f32 %v244, %v456
      %v458 = vsub.f32 1.0, %v457
      %v459 = vmul.f32 %v456, %v458
      %v460 = vadd.f32 %v456, %v459
      %vm461 = vweird.f32 %v244
      %vm462 = vweird.f32 %v456
      %vm463 = vmor %vm461, %vm462
      %v464 = vsel %vm463, %v456, %v460
      %v465 = vand.u32 2147483647, %v244
      %vm466 = vcmp.eq.f32.partialorder %v465, 8.507059e+37
      %v467 = vand.u32 %v244, 2147483648
      %v468 = vor.u32 1.1754944e-38, %v467
      %v469 = vsel %vm466, %v468, %v464
      %v470 = vmul.f32 1.0, %v469
      %v471 = vrcp.pop %v245
      %v472 = vmul.f32 %v245, %v471
      %v473 = vsub.f32 1.0, %v472
      %v474 = vmul.f32 %v471, %v473
      %v475 = vadd.f32 %v471, %v474
      %vm476 = vweird.f32 %v245
      %vm477 = vweird.f32 %v471
      %vm478 = vmor %vm476, %vm477
      %v479 = vsel %vm478, %v471, %v475
      %v480 = vand.u32 2147483647, %v245
      %vm481 = vcmp.eq.f32.partialorder %v480, 8.507059e+37
      %v482 = vand.u32 %v245, 2147483648
      %v483 = vor.u32 1.1754944e-38, %v482
      %v484 = vsel %vm481, %v483, %v479
      %v485 = vmul.f32 1.0, %v484
      %v486 = vmul.f32 %v143, %v260
      %v487 = vmul.f32 %v145, %v275
      %v488 = vmul.f32 %v148, %v290
      %v489 = vmul.f32 %v150, %v305
      %v490 = vmul.f32 %v153, %v320
      %v491 = vmul.f32 %v155, %v335
      %v492 = vmul.f32 %v158, %v350
      %v493 = vmul.f32 %v160, %v365
      %v494 = vmul.f32 %v163, %v380
      %v495 = vmul.f32 %v165, %v395
      %v496 = vmul.f32 %v168, %v410
      %v497 = vmul.f32 %v170, %v425
      %v498 = vmul.f32 %v173, %v440
      %v499 = vmul.f32 %v175, %v455
      %v500 = vmul.f32 %v178, %v470
      %v501 = vmul.f32 %v180, %v485
      %v502 = vpack.c.bf16 %v486, %v486
      %v503 = vpack.c.bf16 %v487, %v487
      %v504 = vpack.c.bf16 %v488, %v488
      %v505 = vpack.c.bf16 %v489, %v489
      %v506 = vpack.c.bf16 %v490, %v490
      %v507 = vpack.c.bf16 %v491, %v491
      %v508 = vpack.c.bf16 %v492, %v492
      %v509 = vpack.c.bf16 %v493, %v493
      %v510 = vpack.c.bf16 %v494, %v494
      %v511 = vpack.c.bf16 %v495, %v495
      %v512 = vpack.c.bf16 %v496, %v496
      %v513 = vpack.c.bf16 %v497, %v497
      %v514 = vpack.c.bf16 %v498, %v498
      %v515 = vpack.c.bf16 %v499, %v499
      %v516 = vpack.c.bf16 %v500, %v500
      %v517 = vpack.c.bf16 %v501, %v501
      %vm518 = vcmask 191488
      %519 = vst.msk [vmem:[#allocation2] sm:$0xf] %vm518, %v502
      %520 = vst.msk [vmem:[#allocation2 + $0x4] sm:$0xf] %vm518, %v503
      %521 = vst.msk [vmem:[#allocation2 + $0x8] sm:$0xf] %vm518, %v504
      %522 = vst.msk [vmem:[#allocation2 + $0xc] sm:$0xf] %vm518, %v505
      %523 = vst.msk [vmem:[#allocation2 + $0x10] sm:$0xf] %vm518, %v506
      %524 = vst.msk [vmem:[#allocation2 + $0x14] sm:$0xf] %vm518, %v507
      %525 = vst.msk [vmem:[#allocation2 + $0x18] sm:$0xf] %vm518, %v508
      %526 = vst.msk [vmem:[#allocation2 + $0x1c] sm:$0xf] %vm518, %v509
      %527 = vst.msk [vmem:[#allocation2 + $0x20] sm:$0xf] %vm518, %v510
      %528 = vst.msk [vmem:[#allocation2 + $0x24] sm:$0xf] %vm518, %v511
      %529 = vst.msk [vmem:[#allocation2 + $0x28] sm:$0xf] %vm518, %v512
      %530 = vst.msk [vmem:[#allocation2 + $0x2c] sm:$0xf] %vm518, %v513
      %531 = vst.msk [vmem:[#allocation2 + $0x30] sm:$0xf] %vm518, %v514
      %532 = vst.msk [vmem:[#allocation2 + $0x34] sm:$0xf] %vm518, %v515
      %533 = vst.msk [vmem:[#allocation2 + $0x38] sm:$0xf] %vm518, %v516
      %534 = vst.msk [vmem:[#allocation2 + $0x3c] sm:$0xf] %vm518, %v517
    $region25: #{tpu_custom_call.1} parent=1 // pred_fallthru
      _
    %v535 = vld [vmem:[#allocation2] sm:$0xf]
    %v536 = vld [vmem:[#allocation2 + $0x4] sm:$0xf]
    %v537 = vld [vmem:[#allocation2 + $0x8] sm:$0xf]
    %v538 = vld [vmem:[#allocation2 + $0xc] sm:$0xf]
    %v539 = vld [vmem:[#allocation2 + $0x10] sm:$0xf]
    %v540 = vld [vmem:[#allocation2 + $0x14] sm:$0xf]
    %v541 = vld [vmem:[#allocation2 + $0x18] sm:$0xf]
    %v542 = vld [vmem:[#allocation2 + $0x1c] sm:$0xf]
    %v543 = vld [vmem:[#allocation2 + $0x20] sm:$0xf]
    %v544 = vld [vmem:[#allocation2 + $0x24] sm:$0xf]
    %v545 = vld [vmem:[#allocation2 + $0x28] sm:$0xf]
    %v546 = vld [vmem:[#allocation2 + $0x2c] sm:$0xf]
    %v547 = vld [vmem:[#allocation2 + $0x30] sm:$0xf]
    %v548 = vld [vmem:[#allocation2 + $0x34] sm:$0xf]
    %v549 = vld [vmem:[#allocation2 + $0x38] sm:$0xf]
    %v550 = vld [vmem:[#allocation2 + $0x3c] sm:$0xf]
    %v551 = vld [vmem:[%s3] sm:$0xf]
    %v552 = vld [vmem:[%s3 + $0x4] sm:$0xf]
    %v553 = vld [vmem:[%s3 + $0x8] sm:$0xf]
    %v554 = vld [vmem:[%s4] sm:$0x1]
    %v556 = vperm.slane %v554, 0
    %v574 = vunpack.c.l.b16 %v535
    %v575 = vunpack.c.l.b16 %v536
    %v576 = vunpack.c.l.b16 %v537
    %v577 = vunpack.c.l.b16 %v538
    %v578 = vunpack.c.l.b16 %v539
    %v579 = vunpack.c.l.b16 %v540
    %v580 = vunpack.c.l.b16 %v541
    %v581 = vunpack.c.l.b16 %v542
    %v582 = vunpack.c.l.b16 %v543
    %v583 = vunpack.c.l.b16 %v544
    %v584 = vunpack.c.l.b16 %v545
    %v585 = vunpack.c.l.b16 %v546
    %v586 = vunpack.c.l.b16 %v547
    %v587 = vunpack.c.l.b16 %v548
    %v588 = vunpack.c.l.b16 %v549
    %v589 = vunpack.c.l.b16 %v550
    %v590 = vpack.c.b16 %v575, %v574
    %v591 = vpack.c.b16 %v577, %v576
    %v592 = vpack.c.b16 %v579, %v578
    %v593 = vpack.c.b16 %v581, %v580
    %v594 = vpack.c.b16 %v583, %v582
    %v595 = vpack.c.b16 %v585, %v584
    %v596 = vpack.c.b16 %v587, %v586
    %v597 = vpack.c.b16 %v589, %v588
    %v601 = vunpack.c.l.b16 %v551
    %v602 = vunpack.c.l.b16 %v552
    %v603 = vunpack.c.l.b16 %v553
    %v604 = vpack.c.b16 %v602, %v601
    %v605 = vpack.c.b16 %v603, %v603
    %vm607 = vcmask 195584
    %v609 = vsel %vm607, %v590, 0
    %v612 = vsel %vm607, %v591, 0
    %v615 = vsel %vm607, %v592, 0
    %v618 = vsel %vm607, %v593, 0
    %v621 = vsel %vm607, %v594, 0
    %v624 = vsel %vm607, %v595, 0
    %v627 = vsel %vm607, %v596, 0
    %v630 = vsel %vm607, %v597, 0
    %vm632 = vcmask 1043456
    %v634 = vsel %vm632, %v605, 0
    %636 = vmatpush.bf16.msra.mxu0 0
    %637 = vmatpush.bf16.msra.mxu0 0
    %638 = vmatpush.bf16.msra.mxu0 0
    %639 = vmatpush.bf16.msra.mxu0 0
    %640 = vmatpush.bf16.msra.mxu0 0
    %641 = vmatpush.bf16.msra.mxu0 0
    %642 = vmatpush.bf16.msra.mxu0 %v634
    %643 = vmatpush.bf16.msra.mxu0 %v604
    %644 = vmatmul.bf16.gmra.mxu0 %v609
    %v645 = vpop.f32.mrf.mxu0
    %v646 = vadd.f32 %v556, %v645
    %v647 = vpop.f32.mrf.mxu0
    %v648 = vadd.f32 %v556, %v647
    %649 = vmatmul.bf16.gmra.mxu0 %v612
    %v650 = vpop.f32.mrf.mxu0
    %v651 = vadd.f32 %v556, %v650
    %v652 = vpop.f32.mrf.mxu0
    %v653 = vadd.f32 %v556, %v652
    %654 = vmatmul.bf16.gmra.mxu0 %v615
    %v655 = vpop.f32.mrf.mxu0
    %v656 = vadd.f32 %v556, %v655
    %v657 = vpop.f32.mrf.mxu0
    %v658 = vadd.f32 %v556, %v657
    %659 = vmatmul.bf16.gmra.mxu0 %v618
    %v660 = vpop.f32.mrf.mxu0
    %v661 = vadd.f32 %v556, %v660
    %v662 = vpop.f32.mrf.mxu0
    %v663 = vadd.f32 %v556, %v662
    %664 = vmatmul.bf16.gmra.mxu0 %v621
    %v665 = vpop.f32.mrf.mxu0
    %v666 = vadd.f32 %v556, %v665
    %v667 = vpop.f32.mrf.mxu0
    %v668 = vadd.f32 %v556, %v667
    %669 = vmatmul.bf16.gmra.mxu0 %v624
    %v670 = vpop.f32.mrf.mxu0
    %v671 = vadd.f32 %v556, %v670
    %v672 = vpop.f32.mrf.mxu0
    %v673 = vadd.f32 %v556, %v672
    %674 = vmatmul.bf16.gmra.mxu0 %v627
    %v675 = vpop.f32.mrf.mxu0
    %v676 = vadd.f32 %v556, %v675
    %v677 = vpop.f32.mrf.mxu0
    %v678 = vadd.f32 %v556, %v677
    %679 = vmatmul.bf16.gmra.mxu0 %v630
    %v680 = vpop.f32.mrf.mxu0
    %v681 = vadd.f32 %v556, %v680
    %v682 = vpop.f32.mrf.mxu0
    %v683 = vadd.f32 %v556, %v682
    %684 = vdwg.mxu0
    %v685 = vxor.u32 %v646, 2147483648
    %v686 = vxor.u32 %v648, 2147483648
    %v687 = vxor.u32 %v651, 2147483648
    %v688 = vxor.u32 %v653, 2147483648
    %v689 = vxor.u32 %v656, 2147483648
    %v690 = vxor.u32 %v658, 2147483648
    %v691 = vxor.u32 %v661, 2147483648
    %v692 = vxor.u32 %v663, 2147483648
    %v693 = vxor.u32 %v666, 2147483648
    %v694 = vxor.u32 %v668, 2147483648
    %v695 = vxor.u32 %v671, 2147483648
    %v696 = vxor.u32 %v673, 2147483648
    %v697 = vxor.u32 %v676, 2147483648
    %v698 = vxor.u32 %v678, 2147483648
    %v699 = vxor.u32 %v681, 2147483648
    %v700 = vxor.u32 %v683, 2147483648
    %v701 = vmul.f32 %v685, 1.442695
    %v702 = vpow.pop %v701
    %v703 = vmul.f32 %v686, 1.442695
    %v704 = vpow.pop %v703
    %v705 = vmul.f32 %v687, 1.442695
    %v706 = vpow.pop %v705
    %v707 = vmul.f32 %v688, 1.442695
    %v708 = vpow.pop %v707
    %v709 = vmul.f32 %v689, 1.442695
    %v710 = vpow.pop %v709
    %v711 = vmul.f32 %v690, 1.442695
    %v712 = vpow.pop %v711
    %v713 = vmul.f32 %v691, 1.442695
    %v714 = vpow.pop %v713
    %v715 = vmul.f32 %v692, 1.442695
    %v716 = vpow.pop %v715
    %v717 = vmul.f32 %v693, 1.442695
    %v718 = vpow.pop %v717
    %v719 = vmul.f32 %v694, 1.442695
    %v720 = vpow.pop %v719
    %v721 = vmul.f32 %v695, 1.442695
    %v722 = vpow.pop %v721
    %v723 = vmul.f32 %v696, 1.442695
    %v724 = vpow.pop %v723
    %v725 = vmul.f32 %v697, 1.442695
    %v726 = vpow.pop %v725
    %v727 = vmul.f32 %v698, 1.442695
    %v728 = vpow.pop %v727
    %v729 = vmul.f32 %v699, 1.442695
    %v730 = vpow.pop %v729
    %v731 = vmul.f32 %v700, 1.442695
    %v732 = vpow.pop %v731
    %v733 = vadd.f32 %v702, 1.0
    %v734 = vadd.f32 %v704, 1.0
    %v735 = vadd.f32 %v706, 1.0
    %v736 = vadd.f32 %v708, 1.0
    %v737 = vadd.f32 %v710, 1.0
    %v738 = vadd.f32 %v712, 1.0
    %v739 = vadd.f32 %v714, 1.0
    %v740 = vadd.f32 %v716, 1.0
    %v741 = vadd.f32 %v718, 1.0
    %v742 = vadd.f32 %v720, 1.0
    %v743 = vadd.f32 %v722, 1.0
    %v744 = vadd.f32 %v724, 1.0
    %v745 = vadd.f32 %v726, 1.0
    %v746 = vadd.f32 %v728, 1.0
    %v747 = vadd.f32 %v730, 1.0
    %v748 = vadd.f32 %v732, 1.0
    %v749 = vrcp.pop %v733
    %v750 = vmul.f32 %v733, %v749
    %v751 = vsub.f32 1.0, %v750
    %v752 = vmul.f32 %v749, %v751
    %v753 = vadd.f32 %v749, %v752
    %vm754 = vweird.f32 %v733
    %vm755 = vweird.f32 %v749
    %vm756 = vmor %vm754, %vm755
    %v757 = vsel %vm756, %v749, %v753
    %v758 = vand.u32 2147483647, %v733
    %vm759 = vcmp.eq.f32.partialorder %v758, 8.507059e+37
    %v760 = vand.u32 %v733, 2147483648
    %v761 = vor.u32 1.1754944e-38, %v760
    %v762 = vsel %vm759, %v761, %v757
    %v763 = vmul.f32 1.0, %v762
    %v764 = vrcp.pop %v734
    %v765 = vmul.f32 %v734, %v764
    %v766 = vsub.f32 1.0, %v765
    %v767 = vmul.f32 %v764, %v766
    %v768 = vadd.f32 %v764, %v767
    %vm769 = vweird.f32 %v734
    %vm770 = vweird.f32 %v764
    %vm771 = vmor %vm769, %vm770
    %v772 = vsel %vm771, %v764, %v768
    %v773 = vand.u32 2147483647, %v734
    %vm774 = vcmp.eq.f32.partialorder %v773, 8.507059e+37
    %v775 = vand.u32 %v734, 2147483648
    %v776 = vor.u32 1.1754944e-38, %v775
    %v777 = vsel %vm774, %v776, %v772
    %v778 = vmul.f32 1.0, %v777
    %v779 = vrcp.pop %v735
    %v780 = vmul.f32 %v735, %v779
    %v781 = vsub.f32 1.0, %v780
    %v782 = vmul.f32 %v779, %v781
    %v783 = vadd.f32 %v779, %v782
    %vm784 = vweird.f32 %v735
    %vm785 = vweird.f32 %v779
    %vm786 = vmor %vm784, %vm785
    %v787 = vsel %vm786, %v779, %v783
    %v788 = vand.u32 2147483647, %v735
    %vm789 = vcmp.eq.f32.partialorder %v788, 8.507059e+37
    %v790 = vand.u32 %v735, 2147483648
    %v791 = vor.u32 1.1754944e-38, %v790
    %v792 = vsel %vm789, %v791, %v787
    %v793 = vmul.f32 1.0, %v792
    %v794 = vrcp.pop %v736
    %v795 = vmul.f32 %v736, %v794
    %v796 = vsub.f32 1.0, %v795
    %v797 = vmul.f32 %v794, %v796
    %v798 = vadd.f32 %v794, %v797
    %vm799 = vweird.f32 %v736
    %vm800 = vweird.f32 %v794
    %vm801 = vmor %vm799, %vm800
    %v802 = vsel %vm801, %v794, %v798
    %v803 = vand.u32 2147483647, %v736
    %vm804 = vcmp.eq.f32.partialorder %v803, 8.507059e+37
    %v805 = vand.u32 %v736, 2147483648
    %v806 = vor.u32 1.1754944e-38, %v805
    %v807 = vsel %vm804, %v806, %v802
    %v808 = vmul.f32 1.0, %v807
    %v809 = vrcp.pop %v737
    %v810 = vmul.f32 %v737, %v809
    %v811 = vsub.f32 1.0, %v810
    %v812 = vmul.f32 %v809, %v811
    %v813 = vadd.f32 %v809, %v812
    %vm814 = vweird.f32 %v737
    %vm815 = vweird.f32 %v809
    %vm816 = vmor %vm814, %vm815
    %v817 = vsel %vm816, %v809, %v813
    %v818 = vand.u32 2147483647, %v737
    %vm819 = vcmp.eq.f32.partialorder %v818, 8.507059e+37
    %v820 = vand.u32 %v737, 2147483648
    %v821 = vor.u32 1.1754944e-38, %v820
    %v822 = vsel %vm819, %v821, %v817
    %v823 = vmul.f32 1.0, %v822
    %v824 = vrcp.pop %v738
    %v825 = vmul.f32 %v738, %v824
    %v826 = vsub.f32 1.0, %v825
    %v827 = vmul.f32 %v824, %v826
    %v828 = vadd.f32 %v824, %v827
    %vm829 = vweird.f32 %v738
    %vm830 = vweird.f32 %v824
    %vm831 = vmor %vm829, %vm830
    %v832 = vsel %vm831, %v824, %v828
    %v833 = vand.u32 2147483647, %v738
    %vm834 = vcmp.eq.f32.partialorder %v833, 8.507059e+37
    %v835 = vand.u32 %v738, 2147483648
    %v836 = vor.u32 1.1754944e-38, %v835
    %v837 = vsel %vm834, %v836, %v832
    %v838 = vmul.f32 1.0, %v837
    %v839 = vrcp.pop %v739
    %v840 = vmul.f32 %v739, %v839
    %v841 = vsub.f32 1.0, %v840
    %v842 = vmul.f32 %v839, %v841
    %v843 = vadd.f32 %v839, %v842
    %vm844 = vweird.f32 %v739
    %vm845 = vweird.f32 %v839
    %vm846 = vmor %vm844, %vm845
    %v847 = vsel %vm846, %v839, %v843
    %v848 = vand.u32 2147483647, %v739
    %vm849 = vcmp.eq.f32.partialorder %v848, 8.507059e+37
    %v850 = vand.u32 %v739, 2147483648
    %v851 = vor.u32 1.1754944e-38, %v850
    %v852 = vsel %vm849, %v851, %v847
    %v853 = vmul.f32 1.0, %v852
    %v854 = vrcp.pop %v740
    %v855 = vmul.f32 %v740, %v854
    %v856 = vsub.f32 1.0, %v855
    %v857 = vmul.f32 %v854, %v856
    %v858 = vadd.f32 %v854, %v857
    %vm859 = vweird.f32 %v740
    %vm860 = vweird.f32 %v854
    %vm861 = vmor %vm859, %vm860
    %v862 = vsel %vm861, %v854, %v858
    %v863 = vand.u32 2147483647, %v740
    %vm864 = vcmp.eq.f32.partialorder %v863, 8.507059e+37
    %v865 = vand.u32 %v740, 2147483648
    %v866 = vor.u32 1.1754944e-38, %v865
    %v867 = vsel %vm864, %v866, %v862
    %v868 = vmul.f32 1.0, %v867
    %v869 = vrcp.pop %v741
    %v870 = vmul.f32 %v741, %v869
    %v871 = vsub.f32 1.0, %v870
    %v872 = vmul.f32 %v869, %v871
    %v873 = vadd.f32 %v869, %v872
    %vm874 = vweird.f32 %v741
    %vm875 = vweird.f32 %v869
    %vm876 = vmor %vm874, %vm875
    %v877 = vsel %vm876, %v869, %v873
    %v878 = vand.u32 2147483647, %v741
    %vm879 = vcmp.eq.f32.partialorder %v878, 8.507059e+37
    %v880 = vand.u32 %v741, 2147483648
    %v881 = vor.u32 1.1754944e-38, %v880
    %v882 = vsel %vm879, %v881, %v877
    %v883 = vmul.f32 1.0, %v882
    %v884 = vrcp.pop %v742
    %v885 = vmul.f32 %v742, %v884
    %v886 = vsub.f32 1.0, %v885
    %v887 = vmul.f32 %v884, %v886
    %v888 = vadd.f32 %v884, %v887
    %vm889 = vweird.f32 %v742
    %vm890 = vweird.f32 %v884
    %vm891 = vmor %vm889, %vm890
    %v892 = vsel %vm891, %v884, %v888
    %v893 = vand.u32 2147483647, %v742
    %vm894 = vcmp.eq.f32.partialorder %v893, 8.507059e+37
    %v895 = vand.u32 %v742, 2147483648
    %v896 = vor.u32 1.1754944e-38, %v895
    %v897 = vsel %vm894, %v896, %v892
    %v898 = vmul.f32 1.0, %v897
    %v899 = vrcp.pop %v743
    %v900 = vmul.f32 %v743, %v899
    %v901 = vsub.f32 1.0, %v900
    %v902 = vmul.f32 %v899, %v901
    %v903 = vadd.f32 %v899, %v902
    %vm904 = vweird.f32 %v743
    %vm905 = vweird.f32 %v899
    %vm906 = vmor %vm904, %vm905
    %v907 = vsel %vm906, %v899, %v903
    %v908 = vand.u32 2147483647, %v743
    %vm909 = vcmp.eq.f32.partialorder %v908, 8.507059e+37
    %v910 = vand.u32 %v743, 2147483648
    %v911 = vor.u32 1.1754944e-38, %v910
    %v912 = vsel %vm909, %v911, %v907
    %v913 = vmul.f32 1.0, %v912
    %v914 = vrcp.pop %v744
    %v915 = vmul.f32 %v744, %v914
    %v916 = vsub.f32 1.0, %v915
    %v917 = vmul.f32 %v914, %v916
    %v918 = vadd.f32 %v914, %v917
    %vm919 = vweird.f32 %v744
    %vm920 = vweird.f32 %v914
    %vm921 = vmor %vm919, %vm920
    %v922 = vsel %vm921, %v914, %v918
    %v923 = vand.u32 2147483647, %v744
    %vm924 = vcmp.eq.f32.partialorder %v923, 8.507059e+37
    %v925 = vand.u32 %v744, 2147483648
    %v926 = vor.u32 1.1754944e-38, %v925
    %v927 = vsel %vm924, %v926, %v922
    %v928 = vmul.f32 1.0, %v927
    %v929 = vrcp.pop %v745
    %v930 = vmul.f32 %v745, %v929
    %v931 = vsub.f32 1.0, %v930
    %v932 = vmul.f32 %v929, %v931
    %v933 = vadd.f32 %v929, %v932
    %vm934 = vweird.f32 %v745
    %vm935 = vweird.f32 %v929
    %vm936 = vmor %vm934, %vm935
    %v937 = vsel %vm936, %v929, %v933
    %v938 = vand.u32 2147483647, %v745
    %vm939 = vcmp.eq.f32.partialorder %v938, 8.507059e+37
    %v940 = vand.u32 %v745, 2147483648
    %v941 = vor.u32 1.1754944e-38, %v940
    %v942 = vsel %vm939, %v941, %v937
    %v943 = vmul.f32 1.0, %v942
    %v944 = vrcp.pop %v746
    %v945 = vmul.f32 %v746, %v944
    %v946 = vsub.f32 1.0, %v945
    %v947 = vmul.f32 %v944, %v946
    %v948 = vadd.f32 %v944, %v947
    %vm949 = vweird.f32 %v746
    %vm950 = vweird.f32 %v944
    %vm951 = vmor %vm949, %vm950
    %v952 = vsel %vm951, %v944, %v948
    %v953 = vand.u32 2147483647, %v746
    %vm954 = vcmp.eq.f32.partialorder %v953, 8.507059e+37
    %v955 = vand.u32 %v746, 2147483648
    %v956 = vor.u32 1.1754944e-38, %v955
    %v957 = vsel %vm954, %v956, %v952
    %v958 = vmul.f32 1.0, %v957
    %v959 = vrcp.pop %v747
    %v960 = vmul.f32 %v747, %v959
    %v961 = vsub.f32 1.0, %v960
    %v962 = vmul.f32 %v959, %v961
    %v963 = vadd.f32 %v959, %v962
    %vm964 = vweird.f32 %v747
    %vm965 = vweird.f32 %v959
    %vm966 = vmor %vm964, %vm965
    %v967 = vsel %vm966, %v959, %v963
    %v968 = vand.u32 2147483647, %v747
    %vm969 = vcmp.eq.f32.partialorder %v968, 8.507059e+37
    %v970 = vand.u32 %v747, 2147483648
    %v971 = vor.u32 1.1754944e-38, %v970
    %v972 = vsel %vm969, %v971, %v967
    %v973 = vmul.f32 1.0, %v972
    %v974 = vrcp.pop %v748
    %v975 = vmul.f32 %v748, %v974
    %v976 = vsub.f32 1.0, %v975
    %v977 = vmul.f32 %v974, %v976
    %v978 = vadd.f32 %v974, %v977
    %vm979 = vweird.f32 %v748
    %vm980 = vweird.f32 %v974
    %vm981 = vmor %vm979, %vm980
    %v982 = vsel %vm981, %v974, %v978
    %v983 = vand.u32 2147483647, %v748
    %vm984 = vcmp.eq.f32.partialorder %v983, 8.507059e+37
    %v985 = vand.u32 %v748, 2147483648
    %v986 = vor.u32 1.1754944e-38, %v985
    %v987 = vsel %vm984, %v986, %v982
    %v988 = vmul.f32 1.0, %v987
    %v989 = vmul.f32 %v646, %v763
    %v990 = vmul.f32 %v648, %v778
    %v991 = vmul.f32 %v651, %v793
    %v992 = vmul.f32 %v653, %v808
    %v993 = vmul.f32 %v656, %v823
    %v994 = vmul.f32 %v658, %v838
    %v995 = vmul.f32 %v661, %v853
    %v996 = vmul.f32 %v663, %v868
    %v997 = vmul.f32 %v666, %v883
    %v998 = vmul.f32 %v668, %v898
    %v999 = vmul.f32 %v671, %v913
    %v1000 = vmul.f32 %v673, %v928
    %v1001 = vmul.f32 %v676, %v943
    %v1002 = vmul.f32 %v678, %v958
    %v1003 = vmul.f32 %v681, %v973
    %v1004 = vmul.f32 %v683, %v988
    %v1005 = vpack.c.bf16 %v989, %v989
    %v1006 = vpack.c.bf16 %v990, %v990
    %v1007 = vpack.c.bf16 %v991, %v991
    %v1008 = vpack.c.bf16 %v992, %v992
    %v1009 = vpack.c.bf16 %v993, %v993
    %v1010 = vpack.c.bf16 %v994, %v994
    %v1011 = vpack.c.bf16 %v995, %v995
    %v1012 = vpack.c.bf16 %v996, %v996
    %v1013 = vpack.c.bf16 %v997, %v997
    %v1014 = vpack.c.bf16 %v998, %v998
    %v1015 = vpack.c.bf16 %v999, %v999
    %v1016 = vpack.c.bf16 %v1000, %v1000
    %v1017 = vpack.c.bf16 %v1001, %v1001
    %v1018 = vpack.c.bf16 %v1002, %v1002
    %v1019 = vpack.c.bf16 %v1003, %v1003
    %v1020 = vpack.c.bf16 %v1004, %v1004
    %1021 = vst [vmem:[#allocation3] sm:$0xf] %v1005
    %1022 = vst [vmem:[#allocation3 + $0x4] sm:$0xf] %v1006
    %1023 = vst [vmem:[#allocation3 + $0x8] sm:$0xf] %v1007
    %1024 = vst [vmem:[#allocation3 + $0xc] sm:$0xf] %v1008
    %1025 = vst [vmem:[#allocation3 + $0x10] sm:$0xf] %v1009
    %1026 = vst [vmem:[#allocation3 + $0x14] sm:$0xf] %v1010
    %1027 = vst [vmem:[#allocation3 + $0x18] sm:$0xf] %v1011
    %1028 = vst [vmem:[#allocation3 + $0x1c] sm:$0xf] %v1012
    %1029 = vst [vmem:[#allocation3 + $0x20] sm:$0xf] %v1013
    %1030 = vst [vmem:[#allocation3 + $0x24] sm:$0xf] %v1014
    %1031 = vst [vmem:[#allocation3 + $0x28] sm:$0xf] %v1015
    %1032 = vst [vmem:[#allocation3 + $0x2c] sm:$0xf] %v1016
    %1033 = vst [vmem:[#allocation3 + $0x30] sm:$0xf] %v1017
    %1034 = vst [vmem:[#allocation3 + $0x34] sm:$0xf] %v1018
    %1035 = vst [vmem:[#allocation3 + $0x38] sm:$0xf] %v1019
    %1036 = vst [vmem:[#allocation3 + $0x3c] sm:$0xf] %v1020
    // Predicated region
    $region26: #{tpu_custom_call.1} parent=1 // pred_check
      _
    $region27: #{tpu_custom_call.1} parent=1 // pred_check_branch
      %1038 = sbr.rel (0) target = $region29
    $region28: #{tpu_custom_call.1} parent=1 // pred_region
      %1040 = vsyncadd [#allocation4], 0
      %s1041 = sshll.u32 [#allocation3], 4
      %s1042 = int_to_ptr.vmem [resolvable:$true] %s1041
      %s1043 = sshll.u32 %s5, 4
      %s1044 = int_to_ptr.hbm [resolvable:$true] %s1043
      %1049 = dma.vmem_to_hbm [thread:$0]  %s1042, 1024, %s1044, [#allocation4], 64, 64, 4
    $region29: #{tpu_custom_call.1} parent=1 // pred_fallthru
      _
    // Predicated region
    $region30: #{tpu_custom_call.1} parent=1 // pred_check
      _
    $region31: #{tpu_custom_call.1} parent=1 // pred_check_branch
      %1051 = sbr.rel (0) target = $region33
    $region32: #{tpu_custom_call.1} parent=1 // pred_region
      %1053 = dma.done [#allocation4], 1024
    $region33: #{tpu_custom_call.1} parent=1 // pred_fallthru
      _
    %1054 = vsyncpa [#allocation4], 1

</llo_original>
